<compile_context>
chip_gen: v7x
topology: tpu7x:2x2x1
jax: 0.10.0
libtpu: 0.0.40
codegen_flags: <defaults>
</compile_context>

<pallas_src>
import functools

import jax
import jax.numpy as jnp
from jax import lax
from jax.experimental import pallas as pl
from jax.experimental.pallas import tpu as pltpu

_LANE = 128


def _round_up(x, m):
    return (x + m - 1) // m * m


def _round_down(x, m):
    return (x // m) * m


def _sublane(itemsize):
    # Rows packed per sublane group: 8 for 32-bit, 16 for bf16, 32 for 8-bit.
    return max(8, 8 * (4 // max(1, itemsize)))


def _vmem_limit_bytes():
    # Generation-aware scoped-VMEM request. v7x has 64 MiB per TensorCore,
    # v5e/v6e have 128 MiB; leave ~16 MiB headroom for compiler internals and
    # never request more than 64 MiB.
    try:
        cap = pltpu.get_tpu_info().vmem_capacity_bytes
    except Exception:  # pragma: no cover - conservative fallback (= v7x)
        cap = 64 * 1024 * 1024
    return max(32 * 1024 * 1024, min(cap - 16 * 1024 * 1024, 64 * 1024 * 1024))


def _gap_rows_kernel(x_ref, o_ref, *, inv_hw, acc_f32):
    # Path A: x_ref is a (tile_rows, H*W) tile; o_ref is (1, tile_rows).
    x = x_ref[...]
    if acc_f32:
        # Upcast only sub-32-bit inputs (bf16/fp8): accuracy + v5e has no bf16 VPU.
        x = x.astype(jnp.float32)
    # Row-wise mean: VPU adds + one cross-lane (XLU) reduce per row. No MXU —
    # the kernel is HBM-bound (~0.03 FLOP/byte).
    row_mean = jnp.sum(x, axis=-1) * inv_hw
    o_ref[...] = row_mean[None, :].astype(o_ref.dtype)


def _gap_accum_kernel(x_ref, o_ref, acc_ref, *, inv_hw, acc_f32, hw, tile_hw,
                      need_mask):
    # Path B: x_ref is a (tile_rows, tile_hw) tile; acc_ref is (1, tile_rows)
    # f32 scratch resident across the "arbitrary" H*W grid axis.
    k = pl.program_id(1)

    @pl.when(k == 0)
    def _():
        acc_ref[...] = jnp.zeros_like(acc_ref)

    x = x_ref[...]
    if acc_f32:
        x = x.astype(jnp.float32)
    if need_mask:
        # Zero out-of-range lanes of the partial last H*W tile (their contents
        # are unspecified padding).
        col = lax.broadcasted_iota(jnp.int32, x.shape, 1) + k * tile_hw
        x = jnp.where(col < hw, x, jnp.zeros_like(x))
    acc_ref[...] += jnp.sum(x, axis=-1)[None, :]

    @pl.when(k == pl.num_programs(1) - 1)
    def _():
        o_ref[...] = (acc_ref[...] * inv_hw).astype(o_ref.dtype)


def global_avg_pool(x: jax.Array, *, _working_budget_bytes=None) -> jax.Array:
    """Equivalent to torch.mean(x, dim=[-2, -1]) for NCHW input."""
    n, c, h, w = x.shape
    rows, hw = n * c, h * w

    # Free, contiguous reshape: puts H*W on the lane axis instead of tiny W.
    x2 = x.reshape(rows, hw)

    itemsize = x.dtype.itemsize
    acc_f32 = itemsize < 4
    sub = _sublane(itemsize)
    inv_hw = 1.0 / float(hw)

    vmem_limit = _vmem_limit_bytes()
    budget = (_working_budget_bytes if _working_budget_bytes is not None
              else int(vmem_limit * 0.7))

    cost = pl.CostEstimate(
        flops=rows * hw,
        transcendentals=0,
        bytes_accessed=rows * hw * itemsize + rows * itemsize,
    )

    def _params(sem):
        return pltpu.CompilerParams(dimension_semantics=sem,
                                    vmem_limit_bytes=vmem_limit)

    # Padded VMEM cost of a full-H*W row tile: 2x double-buffered input plus
    # (for bf16/fp8) the full-tile f32 upcast intermediate.
    lanes_full = _round_up(hw, _LANE)
    per_row_bytes = lanes_full * (2 * itemsize + (4 if acc_f32 else 0))
    rows_fit = max(0, budget // per_row_bytes - sub)  # sublane-padding slack

    if rows_fit >= rows or rows_fit >= _LANE:
        # ---- Path A: 1-D grid over rows, each step reduces full H*W rows ----
        if rows_fit >= rows:
            tile_rows = rows  # single tile: full-extent block dims are legal
        else:
            tile_rows = _round_down(rows_fit, _LANE)
            # Diminishing returns past ~16 MiB per input buffer.
            io_cap = max(_LANE, _round_down(
                16 * 1024 * 1024 // (lanes_full * itemsize), _LANE))
            tile_rows = min(tile_rows, io_cap)
            # >= ~8 grid steps so both v7x TensorCores stay busy and the DMA
            # double-buffer has room to overlap with the reduce.
            tile_rows = min(tile_rows,
                            max(_LANE, _round_up(pl.cdiv(rows, 8), _LANE)))
        grid = (pl.cdiv(rows, tile_rows),)
        # Partial last row block: padded rows yield garbage means but Pallas
        # masks the out-of-range lanes of the (1, tile_rows) output on store.
        out = pl.pallas_call(
            functools.partial(_gap_rows_kernel, inv_hw=inv_hw, acc_f32=acc_f32),
            out_shape=jax.ShapeDtypeStruct((1, rows), x.dtype),
            grid=grid,
            in_specs=[pl.BlockSpec((tile_rows, hw), lambda i: (i, 0))],
            out_specs=pl.BlockSpec((1, tile_rows), lambda i: (0, i)),
            compiler_params=_params(("parallel",)),
            cost_estimate=cost,
        )(x2)
    else:
        # ---- Path B: huge H*W — 2-D grid with VMEM scratch accumulator ----
        if rows <= 256:
            tile_rows = rows  # full extent -> legal block dim at any size
        else:
            tile_rows = min(512, max(_LANE, _round_up(pl.cdiv(rows, 8), _LANE)))
        rows_p = _round_up(tile_rows, sub)
        per_col_bytes = rows_p * (2 * itemsize + (4 if acc_f32 else 0))
        tile_hw = max(_LANE, _round_down(budget // per_col_bytes, _LANE))
        tile_hw = min(tile_hw, _round_up(hw, _LANE))
        grid = (pl.cdiv(rows, tile_rows), pl.cdiv(hw, tile_hw))
        kernel = functools.partial(
            _gap_accum_kernel, inv_hw=inv_hw, acc_f32=acc_f32,
            hw=hw, tile_hw=tile_hw, need_mask=(hw % tile_hw != 0))
        out = pl.pallas_call(
            kernel,
            out_shape=jax.ShapeDtypeStruct((1, rows), x.dtype),
            grid=grid,
            in_specs=[pl.BlockSpec((tile_rows, tile_hw), lambda i, k: (i, k))],
            out_specs=pl.BlockSpec((1, tile_rows), lambda i, k: (0, i)),
            scratch_shapes=[pltpu.VMEM((1, tile_rows), jnp.float32)],
            compiler_params=_params(("parallel", "arbitrary")),
            cost_estimate=cost,
        )(x2)

    return out.reshape(n, c)


if __name__ == "__main__":
    key = jax.random.PRNGKey(0)
    # Small NCHW input consistent with the module's forward.
    x = jax.random.normal(key, (2, 4, 16, 16), dtype=jnp.float32)

    out = jax.block_until_ready(global_avg_pool(x))
    ref = jnp.mean(x, axis=(-2, -1))
    assert out.shape == (2, 4)
    assert jnp.allclose(out, ref, atol=1e-5, rtol=1e-5)

    # Sub-32-bit (f32-accumulation) path.
    xb = x.astype(jnp.bfloat16)
    outb = jax.block_until_ready(global_avg_pool(xb))
    refb = jnp.mean(xb.astype(jnp.float32), axis=(-2, -1)).astype(jnp.bfloat16)
    assert outb.dtype == jnp.bfloat16 and outb.shape == (2, 4)
    assert jnp.allclose(outb.astype(jnp.float32), refb.astype(jnp.float32),
                        atol=2e-2, rtol=2e-2)

    # Force the 2-D accumulator path (large-H*W code path) with a tiny budget.
    out2 = jax.block_until_ready(global_avg_pool(x, _working_budget_bytes=8 * 1024))
    assert jnp.allclose(out2, ref, atol=1e-5, rtol=1e-5)

    # 2-D path where H*W is not a multiple of the hw tile -> lane-mask path.
    x3 = jax.random.normal(jax.random.PRNGKey(0), (2, 4, 15, 15), dtype=jnp.float32)
    out3 = jax.block_until_ready(global_avg_pool(x3, _working_budget_bytes=8 * 1024))
    ref3 = jnp.mean(x3, axis=(-2, -1))
    assert jnp.allclose(out3, ref3, atol=1e-5, rtol=1e-5)

    print("KERNEL_OK")
</pallas_src>

<mosaic_0001>
module attributes {stable_mosaic.version = 11 : i64} {
  func.func @_gap_rows_kernel(%arg0: i32, %arg1: memref<8x256xf32, #tpu.memory_space<vmem>>, %arg2: memref<1x8xf32, #tpu.memory_space<vmem>>) attributes {dimension_semantics = [#tpu.dimension_semantics<parallel>], iteration_bounds = array<i64: 1>, scalar_prefetch = 0 : i64, scratch_operands = 0 : i64, tpu.core_type = #tpu.core_type<tc>, window_params = [{transform_indices = @transform_0, window_bounds = array<i64: 8, 256>}, {transform_indices = @transform_1, window_bounds = array<i64: 1, 8>}]} {
    %c0 = arith.constant 0 : index
    %c0_0 = arith.constant 0 : index
    %0 = vector.load %arg1[%c0, %c0_0] : memref<8x256xf32, #tpu.memory_space<vmem>>, vector<8x256xf32>
    %cst = arith.constant dense<0.000000e+00> : vector<8xf32>
    %1 = vector.multi_reduction <add>, %0, %cst [1] : vector<8x256xf32> to vector<8xf32>
    %cst_1 = arith.constant 3.906250e-03 : f32
    %2 = vector.broadcast %cst_1 : f32 to vector<8xf32>
    %3 = arith.mulf %1, %2 : vector<8xf32>
    %4 = vector.shape_cast %3 : vector<8xf32> to vector<1x8xf32>
    %c0_2 = arith.constant 0 : index
    %c0_3 = arith.constant 0 : index
    %5 = vector.load %arg2[%c0_2, %c0_3] : memref<1x8xf32, #tpu.memory_space<vmem>>, vector<1x8xf32>
    tpu.vector_store %arg2[%c0_2, %c0_3], %4 {strides = array<i32>} : memref<1x8xf32, #tpu.memory_space<vmem>>, vector<1x8xf32>,
    return
  }
  func.func @transform_0(%arg0: i32) -> (i32, i32) {
    %c0_i32 = arith.constant 0 : i32
    %c0_i32_0 = arith.constant 0 : i32
    return %arg0, %c0_i32 : i32, i32
  }
  func.func @transform_1(%arg0: i32) -> (i32, i32) {
    %c0_i32 = arith.constant 0 : i32
    %c0_i32_0 = arith.constant 0 : i32
    return %c0_i32, %arg0 : i32, i32
  }
}

</mosaic_0001>

<llo_original>
// kernel: tpu_custom_call.1
$region0: #{tpu_custom_call.1}
  #allocation0 [shape = 'u32[]', space=smem, size = 0x4, offset = 0x4, fixed_abs, tag = 'smem constant byte address 0x4 - core index']
  #allocation1 [shape = 'u32[144,128]{1,0:T(1,128)}', space=vmem, size = 0x12000, scoped, tag = 'internal scratch']
  %s0 = inlined_call_operand.hbm [shape: f32[8,256], index: 0, kind: input, shape index: {}]
  %s1 = inlined_call_operand.hbm [shape: f32[1,8], index: 1, kind: output, shape index: {}]
  %s2 = sld [smem:[#allocation0]]
  $region18: #{tpu_custom_call.1} parent=0
    _
  %s4 = ssub.s32 1, %s2
  %s5 = scalar_select 0, %s4, %s2
  $region1: #{tpu_custom_call.1} parent=0
    #allocation2 [shape = 'u8[8192]{0}', space=vmem, size = 0x2000, scoped, tag = 'input window, operand 0, single buffered']
    #allocation3 [shape = 's32[1]{0}', space=sflag, size = 0x4, scoped, tag = 'scoped memory for tpu_custom_call.1']
    #allocation4 [shape = 's32[1]{0}', space=sflag, size = 0x4, scoped, tag = 'scoped memory for tpu_custom_call.1']
    #allocation5 [shape = 'u8[512]{0}', space=vmem, size = 0x400, scoped, tag = 'output window, operand 0, single buffered']
    %6 = vsyncpa [#allocation3], 0
    %7 = vsyncpa [#allocation4], 0
    // Predicated region
    $region2: #{tpu_custom_call.1} parent=1 // pred_check
      _
    $region3: #{tpu_custom_call.1} parent=1 // pred_check_branch
      %9 = sbr.rel (0) target = $region5
    $region4: #{tpu_custom_call.1} parent=1 // pred_region
      %s11 = ssub.s32 256, 256
      %12 = vsyncadd [#allocation3], %s11
      %s14 = sshll.u32 [#allocation2], 4
      %s15 = int_to_ptr.vmem [resolvable:$true] %s14
      %17 = dma.hbm_to_vmem [thread:$0]  %s0, 256, %s15, [#allocation3]
    $region5: #{tpu_custom_call.1} parent=1 // pred_fallthru
      _
    // Predicated region
    $region6: #{tpu_custom_call.1} parent=1 // pred_check
      _
    $region7: #{tpu_custom_call.1} parent=1 // pred_check_branch
      %19 = sbr.rel (0) target = $region9
    $region8: #{tpu_custom_call.1} parent=1 // pred_region
      %20 = dma.done [#allocation3], 256
    $region9: #{tpu_custom_call.1} parent=1 // pred_fallthru
      _
    %v21 = vld [vmem:[#allocation2] sm:$0xff]
    %v22 = vld [vmem:[#allocation2 + $0x8] sm:$0xff]
    %v23 = vadd.f32 %v21, %v22
    %24 = vadd.xlane.f32.xlu0 %v23
    %v25 = vpop.xlane.xlu0 %24
    %v26 = vmul.f32 %v25, 0.00390625
    %v28 = vlaneseq
    %v29 = vand.u32 %v28, 127
    %v30 = vlaneseq
    %v31 = vshrl.u32 %v30, 7
    %v32 = vsub.s32 %v29, %v31
    %v33 = vrot.slane %v26, %v32
    %vm35 = vcmask 57344
    %36 = vst.msk [vmem:[#allocation5] sm:$0x1] %vm35, %v33
    // Predicated region
    $region10: #{tpu_custom_call.1} parent=1 // pred_check
      _
    $region11: #{tpu_custom_call.1} parent=1 // pred_check_branch
      %38 = sbr.rel (0) target = $region13
    $region12: #{tpu_custom_call.1} parent=1 // pred_region
      %s40 = ssub.s32 16, 16
      %41 = vsyncadd [#allocation4], %s40
      %s43 = sshll.u32 [#allocation5], 4
      %s44 = int_to_ptr.vmem [resolvable:$true] %s43
      %46 = dma.vmem_to_hbm [thread:$0]  %s44, 16, %s1, [#allocation4]
    $region13: #{tpu_custom_call.1} parent=1 // pred_fallthru
      _
    // Predicated region
    $region14: #{tpu_custom_call.1} parent=1 // pred_check
      _
    $region15: #{tpu_custom_call.1} parent=1 // pred_check_branch
      %48 = sbr.rel (0) target = $region17
    $region16: #{tpu_custom_call.1} parent=1 // pred_region
      %49 = dma.done [#allocation4], 16
    $region17: #{tpu_custom_call.1} parent=1 // pred_fallthru
      _
    %50 = vsyncpa [#allocation3], 1
    %51 = vsyncpa [#allocation4], 1

</llo_original>
